<compile_context>
chip_gen: v7x
topology: tpu7x:2x2x1
jax: 0.10.0
libtpu: 0.0.40
codegen_flags: <defaults>
</compile_context>

<pallas_src>
import functools

import jax
import jax.numpy as jnp
from jax.experimental import pallas as pl
from jax.experimental.pallas import tpu as pltpu


def _rmsnorm_kernel(x_ref, w_ref, o_ref, *, eps):
    # x_ref: (tile_rows, hidden)   w_ref: (1, hidden)   o_ref: (tile_rows, hidden)
    input_dtype = x_ref.dtype
    x = x_ref[...].astype(jnp.float32)                   # hidden_states.to(float32)
    variance = jnp.mean(x * x, axis=-1, keepdims=True)   # pow(2).mean(-1, keepdim=True)
    x = x * jax.lax.rsqrt(variance + eps)                # * rsqrt(var + eps)
    # weight * hidden_states.to(input_dtype)  (matches torch dtype promotion)
    o_ref[...] = (w_ref[...] * x.astype(input_dtype)).astype(o_ref.dtype)


def _sublane_multiple(dtype) -> int:
    # Sublane packing: 8 rows per vreg for 32-bit, 16 for 16-bit, 32 for 8-bit.
    return max(8, 32 // jnp.dtype(dtype).itemsize)


def _vmem_budget_and_limit():
    """Generation-aware (resident block budget, vmem_limit_bytes)."""
    try:
        cap = int(pltpu.get_tpu_info().vmem_capacity_bytes)
    except Exception:
        cap = 64 * 1024 * 1024  # conservative default (v7x-sized VMEM)
    if cap >= 96 * 1024 * 1024:           # v5e / v6e: 128 MiB VMEM per TensorCore
        return 40 * 1024 * 1024, 96 * 1024 * 1024
    return 20 * 1024 * 1024, 48 * 1024 * 1024   # v7x: 64 MiB VMEM per TensorCore


def _pick_tile_rows(rows, hidden, in_dtype, out_dtype, budget) -> int:
    in_b = jnp.dtype(in_dtype).itemsize
    out_b = jnp.dtype(out_dtype).itemsize
    sub = max(_sublane_multiple(in_dtype), _sublane_multiple(out_dtype))
    # Double-buffered input + output blocks, plus ~3 full-tile f32 compute
    # temporaries per row element (f32 upcast, squared/normalized tile,
    # promoted product) that Mosaic materializes for large blocks.
    per_row = (2 * (in_b + out_b) + 3 * 4) * hidden
    t = max(sub, budget // max(per_row, 1))       # byte-budget cap, no row cap
    # No point making the tile larger than the (sublane-rounded) row count.
    rows_ceil = ((rows + sub - 1) // sub) * sub
    t = min(t, rows_ceil)
    # Round down to the sublane multiple (never below it).
    t = max(sub, (t // sub) * sub)
    return int(t)


def _round_tile_rows(tile_rows, in_dtype, out_dtype) -> int:
    # Validate/round an explicitly supplied tile_rows to the sublane packing.
    sub = max(_sublane_multiple(in_dtype), _sublane_multiple(out_dtype))
    return int(max(sub, ((int(tile_rows) + sub - 1) // sub) * sub))


def bit_rms_norm(hidden_states, weight, eps=1e-6, *, tile_rows=None, out_dtype=None):
    """hidden_states: (..., hidden); weight: (hidden,).

    out_dtype=None keeps torch promotion semantics
    (result_type(weight, hidden_states)); pass out_dtype=hidden_states.dtype
    for the reduced-write-traffic fast path.
    """
    orig_shape = hidden_states.shape
    hidden = orig_shape[-1]
    x2d = hidden_states.reshape(-1, hidden)
    rows = x2d.shape[0]

    w2d = weight.reshape(1, hidden)
    if out_dtype is None:
        out_dtype = jnp.result_type(weight.dtype, hidden_states.dtype)

    budget, vmem_limit = _vmem_budget_and_limit()
    if tile_rows is None:
        tile_rows = _pick_tile_rows(rows, hidden, x2d.dtype, out_dtype, budget)
    else:
        tile_rows = _round_tile_rows(tile_rows, x2d.dtype, out_dtype)

    grid = (pl.cdiv(rows, tile_rows),)

    in_b = jnp.dtype(x2d.dtype).itemsize
    out_b = jnp.dtype(out_dtype).itemsize
    w_b = jnp.dtype(weight.dtype).itemsize
    cost = pl.CostEstimate(
        flops=5 * rows * hidden,
        transcendentals=rows,
        bytes_accessed=rows * hidden * (in_b + out_b) + hidden * w_b,
    )

    kernel = functools.partial(_rmsnorm_kernel, eps=eps)
    out = pl.pallas_call(
        kernel,
        out_shape=jax.ShapeDtypeStruct((rows, hidden), out_dtype),
        grid_spec=pltpu.PrefetchScalarGridSpec(
            num_scalar_prefetch=0,
            grid=grid,
            in_specs=[
                pl.BlockSpec((tile_rows, hidden), lambda i: (i, 0)),
                pl.BlockSpec((1, hidden), lambda i: (0, 0)),
            ],
            out_specs=pl.BlockSpec((tile_rows, hidden), lambda i: (i, 0)),
        ),
        compiler_params=pltpu.CompilerParams(
            dimension_semantics=("parallel",),
            vmem_limit_bytes=vmem_limit,
        ),
        cost_estimate=cost,
    )(x2d, w2d)

    return out.reshape(orig_shape[:-1] + (hidden,))


def _reference(x, weight, eps):
    xf = x.astype(jnp.float32)
    var = jnp.mean(xf * xf, axis=-1, keepdims=True)
    return weight * (xf * jax.lax.rsqrt(var + eps)).astype(x.dtype)


if __name__ == "__main__":
    eps = 1e-6
    key = jax.random.PRNGKey(0)

    # --- Test 1: small f32 shape matching the module spec ---
    batch, seq, hidden = 2, 8, 32
    x = jax.random.normal(key, (batch, seq, hidden), dtype=jnp.float32)
    weight = jnp.ones((hidden,), dtype=jnp.float32)   # nn.Parameter(torch.ones(hidden_size))

    y = bit_rms_norm(x, weight, eps=eps)
    y = jax.block_until_ready(y)
    ref = _reference(x, weight, eps)
    assert y.shape == ref.shape and y.dtype == ref.dtype
    assert jnp.allclose(y, ref, atol=1e-5, rtol=1e-5)

    # --- Test 2: bf16 activations, lane-dense hidden, ragged last row block,
    #             explicit (and deliberately unaligned) tile_rows that gets
    #             rounded to the sublane packing. ---
    key2 = jax.random.PRNGKey(1)
    x2 = jax.random.normal(key2, (3, 5, 256), dtype=jnp.bfloat16)   # rows=15 (ragged)
    w2 = jnp.ones((256,), dtype=jnp.float32)
    y2 = bit_rms_norm(x2, w2, eps=eps, tile_rows=10)   # rounded up to 16 internally
    y2 = jax.block_until_ready(y2)
    ref2 = _reference(x2, w2, eps)
    assert y2.shape == ref2.shape and y2.dtype == ref2.dtype
    assert jnp.allclose(y2.astype(jnp.float32), ref2.astype(jnp.float32),
                        atol=1e-2, rtol=1e-2)

    # --- Test 3: bf16 fast-path output (out_dtype knob) ---
    y3 = bit_rms_norm(x2, w2, eps=eps, out_dtype=jnp.bfloat16)
    y3 = jax.block_until_ready(y3)
    assert y3.dtype == jnp.bfloat16 and y3.shape == x2.shape
    assert jnp.allclose(y3.astype(jnp.float32), ref2.astype(jnp.float32),
                        atol=2e-2, rtol=2e-2)

    print("KERNEL_OK")
</pallas_src>

<mosaic_0001>
module attributes {stable_mosaic.version = 11 : i64} {
  func.func @_rmsnorm_kernel(%arg0: i32, %arg1: memref<16x32xf32, #tpu.memory_space<vmem>>, %arg2: memref<1x32xf32, #tpu.memory_space<vmem>>, %arg3: memref<16x32xf32, #tpu.memory_space<vmem>>) attributes {dimension_semantics = [#tpu.dimension_semantics<parallel>], iteration_bounds = array<i64: 1>, scalar_prefetch = 0 : i64, scratch_operands = 0 : i64, tpu.core_type = #tpu.core_type<tc>, window_params = [{transform_indices = @transform_0, window_bounds = array<i64: 16, 32>}, {pipeline_mode = #tpu.pipeline_mode<synchronous>, transform_indices = @transform_1, window_bounds = array<i64: 1, 32>}, {transform_indices = @transform_2, window_bounds = array<i64: 16, 32>}]} {
    %c0 = arith.constant 0 : index
    %c0_0 = arith.constant 0 : index
    %0 = vector.load %arg1[%c0, %c0_0] : memref<16x32xf32, #tpu.memory_space<vmem>>, vector<16x32xf32>
    %1 = arith.mulf %0, %0 : vector<16x32xf32>
    %cst = arith.constant dense<0.000000e+00> : vector<16xf32>
    %2 = vector.multi_reduction <add>, %1, %cst [1] : vector<16x32xf32> to vector<16xf32>
    %3 = vector.shape_cast %2 : vector<16xf32> to vector<16x1xf32>
    %cst_1 = arith.constant 3.200000e+01 : f32
    %4 = vector.broadcast %cst_1 : f32 to vector<16x1xf32>
    %5 = arith.divf %3, %4 : vector<16x1xf32>
    %cst_2 = arith.constant 9.99999997E-7 : f32
    %6 = vector.broadcast %cst_2 : f32 to vector<16x1xf32>
    %7 = arith.addf %5, %6 : vector<16x1xf32>
    %8 = math.rsqrt %7 : vector<16x1xf32>
    %9 = vector.broadcast %8 : vector<16x1xf32> to vector<16x32xf32>
    %10 = arith.mulf %0, %9 : vector<16x32xf32>
    %c0_3 = arith.constant 0 : index
    %c0_4 = arith.constant 0 : index
    %11 = vector.load %arg2[%c0_3, %c0_4] : memref<1x32xf32, #tpu.memory_space<vmem>>, vector<1x32xf32>
    %12 = vector.broadcast %11 : vector<1x32xf32> to vector<16x32xf32>
    %13 = arith.mulf %12, %10 : vector<16x32xf32>
    %c0_5 = arith.constant 0 : index
    %c0_6 = arith.constant 0 : index
    %14 = vector.load %arg3[%c0_5, %c0_6] : memref<16x32xf32, #tpu.memory_space<vmem>>, vector<16x32xf32>
    tpu.vector_store %arg3[%c0_5, %c0_6], %13 {strides = array<i32>} : memref<16x32xf32, #tpu.memory_space<vmem>>, vector<16x32xf32>,
    return
  }
  func.func @transform_0(%arg0: i32) -> (i32, i32) {
    %c0_i32 = arith.constant 0 : i32
    %c0_i32_0 = arith.constant 0 : i32
    return %arg0, %c0_i32 : i32, i32
  }
  func.func @transform_1(%arg0: i32) -> (i32, i32) {
    %c0_i32 = arith.constant 0 : i32
    %c0_i32_0 = arith.constant 0 : i32
    %c0_i32_1 = arith.constant 0 : i32
    return %c0_i32, %c0_i32_0 : i32, i32
  }
  func.func @transform_2(%arg0: i32) -> (i32, i32) {
    %c0_i32 = arith.constant 0 : i32
    %c0_i32_0 = arith.constant 0 : i32
    return %arg0, %c0_i32 : i32, i32
  }
}

</mosaic_0001>

<llo_original>
// kernel: tpu_custom_call.1
$region0: #{tpu_custom_call.1}
  #allocation0 [shape = 'u32[]', space=smem, size = 0x4, offset = 0x4, fixed_abs, tag = 'smem constant byte address 0x4 - core index']
  #allocation1 [shape = 'u32[144,128]{1,0:T(1,128)}', space=vmem, size = 0x12000, scoped, tag = 'internal scratch']
  %s0 = inlined_call_operand.hbm [shape: f32[16,32], index: 0, kind: input, shape index: {}]
  %s1 = inlined_call_operand.vmem [shape: f32[1,32], index: 1, kind: input, shape index: {}]
  %s2 = inlined_call_operand.hbm [shape: f32[16,32], index: 2, kind: output, shape index: {}]
  %s3 = sld [smem:[#allocation0]]
  $region22: #{tpu_custom_call.1} parent=0
    _
  %s5 = ssub.s32 1, %s3
  %s6 = scalar_select 0, %s5, %s3
  $region1: #{tpu_custom_call.1} parent=0
    #allocation2 [shape = 'u8[8192]{0}', space=vmem, size = 0x2000, scoped, tag = 'input window, operand 0, single buffered']
    #allocation3 [shape = 's32[1]{0}', space=sflag, size = 0x4, scoped, tag = 'scoped memory for tpu_custom_call.1']
    #allocation4 [shape = 's32[1]{0}', space=sflag, size = 0x4, scoped, tag = 'scoped memory for tpu_custom_call.1']
    #allocation5 [shape = 'u8[8192]{0}', space=vmem, size = 0x2000, scoped, tag = 'output window, operand 0, single buffered']
    %7 = vsyncpa [#allocation3], 0
    %8 = vsyncpa [#allocation4], 0
    // Predicated region
    $region2: #{tpu_custom_call.1} parent=1 // pred_check
      _
    $region3: #{tpu_custom_call.1} parent=1 // pred_check_branch
      %10 = sbr.rel (0) target = $region5
    $region4: #{tpu_custom_call.1} parent=1 // pred_region
      %s12 = ssub.s32 256, 256
      %13 = vsyncadd [#allocation3], %s12
      %s14 = sshll.u32 [#allocation2], 4
      %s15 = int_to_ptr.vmem [resolvable:$true] %s14
      %20 = dma.hbm_to_vmem [thread:$0]  %s0, 256, %s15, [#allocation3], 128, 128, 8
    $region5: #{tpu_custom_call.1} parent=1 // pred_fallthru
      _
    // Predicated region
    $region6: #{tpu_custom_call.1} parent=1 // pred_check
      _
    $region7: #{tpu_custom_call.1} parent=1 // pred_check_branch
      %22 = sbr.rel (0) target = $region9
    $region8: #{tpu_custom_call.1} parent=1 // pred_region
      _
    $region9: #{tpu_custom_call.1} parent=1 // pred_fallthru
      _
    // Predicated region
    $region10: #{tpu_custom_call.1} parent=1 // pred_check
      _
    $region11: #{tpu_custom_call.1} parent=1 // pred_check_branch
      %24 = sbr.rel (0) target = $region13
    $region12: #{tpu_custom_call.1} parent=1 // pred_region
      %25 = dma.done [#allocation3], 256
    $region13: #{tpu_custom_call.1} parent=1 // pred_fallthru
      _
    %v26 = vld [vmem:[#allocation2] sm:$0xff]
    %v27 = vld [vmem:[#allocation2 + $0x8] sm:$0xff]
    %v28 = vmul.f32 %v26, %v26
    %v29 = vmul.f32 %v27, %v27
    %vm30 = vcmask 261120
    %v31 = vsel %vm30, %v28, 0.0
    %32 = vadd.xlane.f32.xlu0 %v31
    %v33 = vpop.xlane.xlu0 %32
    %v34 = vsel %vm30, %v29, 0.0
    %35 = vadd.xlane.f32.xlu0 %v34
    %v36 = vpop.xlane.xlu0 %35
    %v37 = vrcp.pop 32.0
    %v38 = vmul.f32 %v33, %v37
    %v39 = vmul.f32 %v36, %v37
    %v40 = vadd.f32 %v38, 1e-06
    %v41 = vadd.f32 %v39, 1e-06
    %v42 = vrsqrt.pop %v40
    %v43 = vrsqrt.pop %v41
    %v44 = vmul.f32 %v26, %v42
    %v45 = vmul.f32 %v27, %v43
    %v46 = vld [vmem:[%s1] sm:$0x1]
    %v48 = vlaneseq
    %v49 = vshrl.u32 %v48, 7
    %v50 = vsub.s32 0, %v49
    %v51 = vrot.slane %v46, %v50
    %v53 = vmul.f32 %v51, %v44
    %v54 = vmul.f32 %v51, %v45
    %55 = vst.msk [vmem:[#allocation5] sm:$0xff] %vm30, %v53
    %56 = vst.msk [vmem:[#allocation5 + $0x8] sm:$0xff] %vm30, %v54
    // Predicated region
    $region14: #{tpu_custom_call.1} parent=1 // pred_check
      _
    $region15: #{tpu_custom_call.1} parent=1 // pred_check_branch
      %58 = sbr.rel (0) target = $region17
    $region16: #{tpu_custom_call.1} parent=1 // pred_region
      %s60 = ssub.s32 256, 256
      %61 = vsyncadd [#allocation4], %s60
      %s62 = sshll.u32 [#allocation5], 4
      %s63 = int_to_ptr.vmem [resolvable:$true] %s62
      %68 = dma.vmem_to_hbm [thread:$0]  %s63, 256, %s2, [#allocation4], 128, 128, 8
    $region17: #{tpu_custom_call.1} parent=1 // pred_fallthru
      _
    // Predicated region
    $region18: #{tpu_custom_call.1} parent=1 // pred_check
      _
    $region19: #{tpu_custom_call.1} parent=1 // pred_check_branch
      %70 = sbr.rel (0) target = $region21
    $region20: #{tpu_custom_call.1} parent=1 // pred_region
      %71 = dma.done [#allocation4], 256
    $region21: #{tpu_custom_call.1} parent=1 // pred_fallthru
      _
    %72 = vsyncpa [#allocation3], 1
    %73 = vsyncpa [#allocation4], 1

</llo_original>
